<compile_context>
chip_gen: v5e
topology: v5e:2x2
jax: 0.10.0
libtpu: 0.0.40
codegen_flags: <defaults>
</compile_context>

<pallas_src>
import functools
import math

import jax
import jax.numpy as jnp
from jax import lax
from jax.experimental import pallas as pl
from jax.experimental.pallas import tpu as pltpu


def _round_up(x, m):
    return ((x + m - 1) // m) * m


def _pad2(a, rows, cols):
    return jnp.pad(a, ((0, rows - a.shape[0]), (0, cols - a.shape[1])))


def _vmem_cap_bytes():
    """~75% of the chip's VMEM if queryable; 48 MiB fallback (safe under v7x's 64 MiB)."""
    try:
        cap = getattr(pltpu.get_tpu_info(), "vmem_capacity_bytes", None)
        if cap:
            return int(cap) * 3 // 4
    except Exception:
        pass
    return 48 * 1024 * 1024


def _dense_var_kernel(x_ref, wm_ref, ws_ref, zw_ref, bias_ref, o_ref, acc_ref,
                      *, compute_dtype):
    """One (batch-tile, out-tile, in-tile) grid step of y = x @ (wm + zw*|ws|).T + b."""
    k = pl.program_id(2)

    @pl.when(k == 0)
    def _():
        acc_ref[...] = jnp.zeros_like(acc_ref)

    cd = compute_dtype
    # Reparameterized weight sample for this (out-tile, in-tile).  bf16 inputs keep the
    # sampling arithmetic in bf16 (v6e/v7x bf16 VALUs; halves the VMEM temp); f32 inputs
    # sample in f32.  The sampled weight stays (out, in): the MXU contracts both operands
    # on the shared `in` axis (x @ w.T) so no in-kernel transpose is needed.
    w = wm_ref[...].astype(cd) + zw_ref[...].astype(cd) * jnp.abs(ws_ref[...].astype(cd))
    acc_ref[...] += lax.dot_general(
        x_ref[...], w.astype(x_ref.dtype),
        dimension_numbers=(((1,), (1,)), ((), ())),
        preferred_element_type=jnp.float32)

    @pl.when(k == pl.num_programs(2) - 1)
    def _():
        # bias_ref rows: 0 = b_mean, 1 = b_std, 2 = z_b   (single merged stream)
        bm = bias_ref[0:1, :].astype(jnp.float32)
        bs = bias_ref[1:2, :].astype(jnp.float32)
        zb = bias_ref[2:3, :].astype(jnp.float32)
        b = bm + zb * jnp.abs(bs)                      # (1, tn), broadcasts over rows
        o_ref[...] = (acc_ref[...] + b).astype(o_ref.dtype)


def dense_variational_forward(x, w_mean, w_std, b_mean, b_std, *,
                              z_w=None, z_b=None, key=None,
                              tm=None, tn=256, tk=512, out_dtype=None):
    """Bayesian linear forward: y = x @ (w_mean + z_w*|w_std|).T + (b_mean + z_b*|b_std|).

    Provide z_w/z_b explicitly (reproducible path), or a PRNG `key` to draw fresh
    standard-normal noise host-side (mirrors the module's make_z()).
    """
    if out_dtype is None:
        out_dtype = x.dtype
    B, in_f = x.shape
    out_f = w_mean.shape[0]
    assert w_mean.shape == (out_f, in_f) and w_std.shape == (out_f, in_f)
    assert tn % 128 == 0 and tk % 128 == 0

    if z_w is None or z_b is None:
        assert key is not None, "provide z_w/z_b or a PRNG key"
        kw, kb = jax.random.split(key)
        z_w = jax.random.normal(kw, (out_f, in_f), jnp.float32).astype(w_mean.dtype)
        z_b = jax.random.normal(kb, (out_f,), jnp.float32).astype(b_mean.dtype)
    z_w = jnp.reshape(z_w, (out_f, in_f))
    z_b = jnp.reshape(z_b, (out_f,))

    # ---- tiling -------------------------------------------------------------------
    isz = lambda a: jnp.dtype(a.dtype).itemsize
    m_sub = {4: 8, 2: 16, 1: 32}.get(isz(x), 8)        # sublane multiple per dtype
    B_aligned = _round_up(B, m_sub)

    if tm is None:
        # ni == 1 whenever the padded batch fits a single tile: weight tiles are DMA'd
        # and the reparameterization is executed exactly once (dominant HBM stream).
        tm_e = min(B_aligned, 1024)
    else:
        tm_e = min(_round_up(tm, m_sub), B_aligned)
    tn_e = min(tn, _round_up(out_f, 128))
    tk_e = min(tk, _round_up(in_f, 128))

    Bp = _round_up(B, tm_e)
    out_p = _round_up(out_f, tn_e)
    in_p = _round_up(in_f, tk_e)
    ni, nj = Bp // tm_e, out_p // tn_e

    # v7x megacore: if the batch axis is a single block, keep an even number of
    # out-blocks so both TensorCores get work.
    if ni == 1 and nj % 2 == 1 and tn_e >= 256 and (tn_e // 2) % 128 == 0:
        tn_e //= 2
        out_p = _round_up(out_f, tn_e)
        nj = out_p // tn_e

    grid = (ni, nj, in_p // tk_e)

    # ---- padded (lane-dense) operands ----------------------------------------------
    xp = _pad2(x, Bp, in_p)
    wmp = _pad2(w_mean, out_p, in_p)
    wsp = _pad2(w_std, out_p, in_p)      # zero pad -> |std| = 0 -> padded weights are 0
    zwp = _pad2(z_w, out_p, in_p)
    bias_p = _pad2(jnp.stack([b_mean, b_std, z_b], axis=0), 3, out_p)

    # ---- specs ----------------------------------------------------------------------
    x_spec = pl.BlockSpec((tm_e, tk_e), lambda i, j, k: (i, k))
    w_spec = pl.BlockSpec((tn_e, tk_e), lambda i, j, k: (j, k))
    b_spec = pl.BlockSpec((3, tn_e), lambda i, j, k: (0, j))
    o_spec = pl.BlockSpec((tm_e, tn_e), lambda i, j, k: (i, j))
    acc = pltpu.VMEM((tm_e, tn_e), jnp.float32)

    # Scoped-VMEM sizing from the actual tile footprint (double buffers on every streamed
    # tile + f32 accumulator), 2x headroom, floored at 32 MiB, capped below chip VMEM.
    est = 2 * (tm_e * tk_e * isz(xp)
               + tn_e * tk_e * (isz(wmp) + isz(wsp) + isz(zwp))
               + 3 * tn_e * isz(bias_p)
               + tm_e * tn_e * jnp.dtype(out_dtype).itemsize)
    est += tm_e * tn_e * 4
    vmem_limit = int(min(max(2 * est, 32 * 1024 * 1024), _vmem_cap_bytes()))

    cost = pl.CostEstimate(
        flops=int(2 * Bp * out_p * in_p),
        transcendentals=0,
        bytes_accessed=int(xp.size * isz(xp) + wmp.size * isz(wmp) + wsp.size * isz(wsp)
                           + zwp.size * isz(zwp) + bias_p.size * isz(bias_p)
                           + Bp * out_p * jnp.dtype(out_dtype).itemsize))

    compute_dtype = x.dtype if x.dtype == jnp.bfloat16 else jnp.float32
    kernel = functools.partial(_dense_var_kernel, compute_dtype=compute_dtype)

    y_p = pl.pallas_call(
        kernel,
        out_shape=jax.ShapeDtypeStruct((Bp, out_p), out_dtype),
        grid_spec=pltpu.PrefetchScalarGridSpec(
            num_scalar_prefetch=0, grid=grid,
            in_specs=[x_spec, w_spec, w_spec, w_spec, b_spec],
            out_specs=o_spec,
            scratch_shapes=[acc]),
        compiler_params=pltpu.CompilerParams(
            dimension_semantics=("parallel", "parallel", "arbitrary"),
            vmem_limit_bytes=vmem_limit),
        cost_estimate=cost,
    )(xp, wmp, wsp, zwp, bias_p)

    return y_p[:B, :out_f]


def reference_forward(x, w_mean, w_std, z_w, b_mean, b_std, z_b):
    """Pure-JAX reference with the same dtype handling as the kernel."""
    cd = x.dtype if x.dtype == jnp.bfloat16 else jnp.float32
    f32 = jnp.float32
    w = (w_mean.astype(cd) + z_w.astype(cd) * jnp.abs(w_std.astype(cd))).astype(x.dtype)
    b = (b_mean.astype(f32) + z_b.astype(f32) * jnp.abs(b_std.astype(f32))).reshape(1, -1)
    y = lax.dot_general(x, w, (((1,), (1,)), ((), ())),
                        preferred_element_type=f32,
                        precision=lax.Precision.HIGHEST)
    return (y + b).astype(x.dtype)


def init_params(key, in_features, out_features):
    """Deterministic init matching Dense_Variational.reset_parameters()."""
    k_w, k_b = jax.random.split(key, 2)
    bound = 1.0 / math.sqrt(in_features)   # kaiming_uniform_(a=sqrt(5)) on (out, in)
    w_mean = jax.random.uniform(k_w, (out_features, in_features), jnp.float32, -bound, bound)
    w_std = jnp.full((out_features, in_features), 0.1, jnp.float32)
    b_mean = jax.random.uniform(k_b, (out_features,), jnp.float32, -bound, bound)
    b_std = jnp.full((out_features,), 0.1, jnp.float32)
    return w_mean, w_std, b_mean, b_std


if __name__ == "__main__":
    # Small but deliberately not tile-aligned shapes -> exercises padding + reduction grid.
    B, in_features, out_features = 20, 160, 192

    key = jax.random.PRNGKey(0)
    k_params, k_x, k_zw, k_zb, k_fwd = jax.random.split(key, 5)
    w_mean, w_std, b_mean, b_std = init_params(k_params, in_features, out_features)
    x = jax.random.normal(k_x, (B, in_features), jnp.float32)
    z_w = jax.random.normal(k_zw, (out_features, in_features), jnp.float32)
    z_b = jax.random.normal(k_zb, (out_features,), jnp.float32)

    y_ref = reference_forward(x, w_mean, w_std, z_w, b_mean, b_std, z_b)

    # --- 1) f32, small explicit tiles -> (2,2,2) grid with a real k-reduction.
    y = dense_variational_forward(x, w_mean, w_std, b_mean, b_std,
                                  z_w=z_w, z_b=z_b, tm=16, tn=128, tk=128)
    y = jax.block_until_ready(y)
    assert y.shape == (B, out_features)
    assert jnp.allclose(y, y_ref, atol=3e-2, rtol=3e-2), \
        float(jnp.max(jnp.abs(y - y_ref)))

    # --- 2) f32, default tiling -> single batch tile (ni == 1), weights streamed once.
    y2 = jax.block_until_ready(dense_variational_forward(
        x, w_mean, w_std, b_mean, b_std, z_w=z_w, z_b=z_b))
    assert jnp.allclose(y2, y_ref, atol=3e-2, rtol=3e-2)

    # --- 3) bf16 params + activations: bf16 reparameterization, f32 accumulation.
    bf16 = jnp.bfloat16
    yb = jax.block_until_ready(dense_variational_forward(
        x.astype(bf16), w_mean.astype(bf16), w_std.astype(bf16),
        b_mean.astype(bf16), b_std.astype(bf16),
        z_w=z_w.astype(bf16), z_b=z_b.astype(bf16)))
    yb_ref = reference_forward(x.astype(bf16), w_mean.astype(bf16), w_std.astype(bf16),
                               z_w.astype(bf16), b_mean.astype(bf16), b_std.astype(bf16),
                               z_b.astype(bf16))
    assert yb.dtype == bf16
    assert jnp.allclose(yb.astype(jnp.float32), yb_ref.astype(jnp.float32),
                        atol=7e-2, rtol=7e-2)

    # --- 4) key-driven path: fresh host-side N(0,1) per call (mirrors module.make_z()).
    y3 = jax.block_until_ready(dense_variational_forward(
        x, w_mean, w_std, b_mean, b_std, key=k_fwd))
    assert y3.shape == (B, out_features)
    assert bool(jnp.all(jnp.isfinite(y3)))

    print("KERNEL_OK")
</pallas_src>

<mosaic_0001>
module attributes {stable_mosaic.version = 11 : i64} {
  func.func @_dense_var_kernel(%arg0: i32, %arg1: i32, %arg2: i32, %arg3: memref<16x128xf32, #tpu.memory_space<vmem>>, %arg4: memref<128x128xf32, #tpu.memory_space<vmem>>, %arg5: memref<128x128xf32, #tpu.memory_space<vmem>>, %arg6: memref<128x128xf32, #tpu.memory_space<vmem>>, %arg7: memref<3x128xf32, #tpu.memory_space<vmem>>, %arg8: memref<16x128xf32, #tpu.memory_space<vmem>>, %arg9: memref<16x128xf32, #tpu.memory_space<vmem>>) attributes {dimension_semantics = [#tpu.dimension_semantics<parallel>, #tpu.dimension_semantics<parallel>, #tpu.dimension_semantics<arbitrary>], iteration_bounds = array<i64: 2, 2, 2>, scalar_prefetch = 0 : i64, scratch_operands = 1 : i64, tpu.core_type = #tpu.core_type<tc>, window_params = [{transform_indices = @transform_0, window_bounds = array<i64: 16, 128>}, {transform_indices = @transform_1, window_bounds = array<i64: 128, 128>}, {transform_indices = @transform_2, window_bounds = array<i64: 128, 128>}, {transform_indices = @transform_3, window_bounds = array<i64: 128, 128>}, {transform_indices = @transform_4, window_bounds = array<i64: 3, 128>}, {transform_indices = @transform_5, window_bounds = array<i64: 16, 128>}]} {
    %c0_i32 = arith.constant 0 : i32
    %0 = arith.cmpi eq, %arg2, %c0_i32 : i32
    %1 = arith.extui %0 : i1 to i32
    %c0_i32_0 = arith.constant 0 : i32
    %2 = arith.cmpi ne, %1, %c0_i32_0 : i32
    scf.if %2 {
      %cst_13 = arith.constant 0.000000e+00 : f32
      %17 = vector.broadcast %cst_13 : f32 to vector<16x128xf32>
      %c0_14 = arith.constant 0 : index
      %c0_15 = arith.constant 0 : index
      %18 = vector.load %arg9[%c0_14, %c0_15] : memref<16x128xf32, #tpu.memory_space<vmem>>, vector<16x128xf32>
      tpu.vector_store %arg9[%c0_14, %c0_15], %17 {strides = array<i32>} : memref<16x128xf32, #tpu.memory_space<vmem>>, vector<16x128xf32>,
    } else {
    }
    %c0 = arith.constant 0 : index
    %c0_1 = arith.constant 0 : index
    %3 = vector.load %arg4[%c0, %c0_1] : memref<128x128xf32, #tpu.memory_space<vmem>>, vector<128x128xf32>
    %c0_2 = arith.constant 0 : index
    %c0_3 = arith.constant 0 : index
    %4 = vector.load %arg6[%c0_2, %c0_3] : memref<128x128xf32, #tpu.memory_space<vmem>>, vector<128x128xf32>
    %c0_4 = arith.constant 0 : index
    %c0_5 = arith.constant 0 : index
    %5 = vector.load %arg5[%c0_4, %c0_5] : memref<128x128xf32, #tpu.memory_space<vmem>>, vector<128x128xf32>
    %6 = math.absf %5 : vector<128x128xf32>
    %7 = arith.mulf %4, %6 : vector<128x128xf32>
    %8 = arith.addf %3, %7 : vector<128x128xf32>
    %c0_6 = arith.constant 0 : index
    %c0_7 = arith.constant 0 : index
    %9 = vector.load %arg9[%c0_6, %c0_7] : memref<16x128xf32, #tpu.memory_space<vmem>>, vector<16x128xf32>
    %c0_8 = arith.constant 0 : index
    %c0_9 = arith.constant 0 : index
    %10 = vector.load %arg3[%c0_8, %c0_9] : memref<16x128xf32, #tpu.memory_space<vmem>>, vector<16x128xf32>
    %cst = arith.constant dense<0.000000e+00> : vector<16x128xf32>
    %11 = tpu.matmul %10, %8, %cst {dimension_numbers = #tpu.dot_dimension_numbers<[1], [1], [0], [0], [0, 0, 1, 0], [], []>} : vector<16x128xf32>, vector<128x128xf32>, vector<16x128xf32> -> vector<16x128xf32>
    %12 = arith.addf %9, %11 : vector<16x128xf32>
    %c0_10 = arith.constant 0 : index
    %c0_11 = arith.constant 0 : index
    %13 = vector.load %arg9[%c0_10, %c0_11] : memref<16x128xf32, #tpu.memory_space<vmem>>, vector<16x128xf32>
    tpu.vector_store %arg9[%c0_10, %c0_11], %12 {strides = array<i32>} : memref<16x128xf32, #tpu.memory_space<vmem>>, vector<16x128xf32>,
    %c1_i32 = arith.constant 1 : i32
    %14 = arith.cmpi eq, %arg2, %c1_i32 : i32
    %15 = arith.extui %14 : i1 to i32
    %c0_i32_12 = arith.constant 0 : i32
    %16 = arith.cmpi ne, %15, %c0_i32_12 : i32
    scf.if %16 {
      %c0_13 = arith.constant 0 : index
      %c0_14 = arith.constant 0 : index
      %17 = vector.load %arg7[%c0_13, %c0_14] : memref<3x128xf32, #tpu.memory_space<vmem>>, vector<1x128xf32>
      %c1 = arith.constant 1 : index
      %c0_15 = arith.constant 0 : index
      %18 = vector.load %arg7[%c1, %c0_15] : memref<3x128xf32, #tpu.memory_space<vmem>>, vector<1x128xf32>
      %c2 = arith.constant 2 : index
      %c0_16 = arith.constant 0 : index
      %19 = vector.load %arg7[%c2, %c0_16] : memref<3x128xf32, #tpu.memory_space<vmem>>, vector<1x128xf32>
      %20 = math.absf %18 : vector<1x128xf32>
      %21 = arith.mulf %19, %20 : vector<1x128xf32>
      %22 = arith.addf %17, %21 : vector<1x128xf32>
      %c0_17 = arith.constant 0 : index
      %c0_18 = arith.constant 0 : index
      %23 = vector.load %arg9[%c0_17, %c0_18] : memref<16x128xf32, #tpu.memory_space<vmem>>, vector<16x128xf32>
      %24 = vector.broadcast %22 : vector<1x128xf32> to vector<16x128xf32>
      %25 = arith.addf %23, %24 : vector<16x128xf32>
      %c0_19 = arith.constant 0 : index
      %c0_20 = arith.constant 0 : index
      %26 = vector.load %arg8[%c0_19, %c0_20] : memref<16x128xf32, #tpu.memory_space<vmem>>, vector<16x128xf32>
      tpu.vector_store %arg8[%c0_19, %c0_20], %25 {strides = array<i32>} : memref<16x128xf32, #tpu.memory_space<vmem>>, vector<16x128xf32>,
    } else {
    }
    return
  }
  func.func @transform_0(%arg0: i32, %arg1: i32, %arg2: i32) -> (i32, i32) {
    %c0_i32 = arith.constant 0 : i32
    return %arg0, %arg2 : i32, i32
  }
  func.func @transform_1(%arg0: i32, %arg1: i32, %arg2: i32) -> (i32, i32) {
    %c0_i32 = arith.constant 0 : i32
    return %arg1, %arg2 : i32, i32
  }
  func.func @transform_2(%arg0: i32, %arg1: i32, %arg2: i32) -> (i32, i32) {
    %c0_i32 = arith.constant 0 : i32
    return %arg1, %arg2 : i32, i32
  }
  func.func @transform_3(%arg0: i32, %arg1: i32, %arg2: i32) -> (i32, i32) {
    %c0_i32 = arith.constant 0 : i32
    return %arg1, %arg2 : i32, i32
  }
  func.func @transform_4(%arg0: i32, %arg1: i32, %arg2: i32) -> (i32, i32) {
    %c0_i32 = arith.constant 0 : i32
    %c0_i32_0 = arith.constant 0 : i32
    return %c0_i32, %arg1 : i32, i32
  }
  func.func @transform_5(%arg0: i32, %arg1: i32, %arg2: i32) -> (i32, i32) {
    %c0_i32 = arith.constant 0 : i32
    return %arg0, %arg1 : i32, i32
  }
}

</mosaic_0001>

<llo_original>
// kernel: tpu_custom_call.1
$region0: #{tpu_custom_call.1}
  #allocation0 [shape = 'u32[]', space=smem, size = 0x4, offset = 0x4, fixed_abs, tag = 'smem constant byte address 0x4 - core index']
  #allocation1 [shape = 'u32[72,128]{1,0:T(1,128)}', space=vmem, size = 0x9000, scoped, tag = 'internal scratch']
  #allocation2 [shape = 'f32[16,128]{1,0:T(8,128)}', space=vmem, size = 0x2000, scoped, tag = 'scratch operand']
  %s0 = inlined_call_operand.hbm [shape: f32[32,256], index: 0, kind: input, shape index: {}]
  %s1 = inlined_call_operand.hbm [shape: f32[256,256], index: 1, kind: input, shape index: {}]
  %s2 = inlined_call_operand.hbm [shape: f32[256,256], index: 2, kind: input, shape index: {}]
  %s3 = inlined_call_operand.hbm [shape: f32[256,256], index: 3, kind: input, shape index: {}]
  %s4 = inlined_call_operand.hbm [shape: f32[3,256], index: 4, kind: input, shape index: {}]
  %s5 = inlined_call_operand.hbm [shape: f32[32,256], index: 5, kind: output, shape index: {}]
  %s6 = sld [smem:[#allocation0]]
  $region81: #{tpu_custom_call.1} parent=0
    _
  %s8 = ssub.s32 1, %s6
  %s9 = scalar_select 0, %s8, %s6
  $region1: #{tpu_custom_call.1} parent=0
    #allocation3 [shape = 'u8[16384]{0}', space=vmem, size = 0x4000, scoped, tag = 'input window, operand 0']
    #allocation4 [shape = 's32[2]{0}', space=sflag, size = 0x8, scoped, tag = 'scoped memory for tpu_custom_call.1']
    #allocation5 [shape = 's32[2]{0}', space=sflag, size = 0x8, scoped, tag = 'scoped memory for tpu_custom_call.1']
    #allocation6 [shape = 'u8[131072]{0}', space=vmem, size = 0x20000, scoped, tag = 'input window, operand 1']
    #allocation7 [shape = 's32[2]{0}', space=sflag, size = 0x8, scoped, tag = 'scoped memory for tpu_custom_call.1']
    #allocation8 [shape = 'u8[131072]{0}', space=vmem, size = 0x20000, scoped, tag = 'input window, operand 2']
    #allocation9 [shape = 'u8[131072]{0}', space=vmem, size = 0x20000, scoped, tag = 'input window, operand 3']
    #allocation10 [shape = 's32[2]{0}', space=sflag, size = 0x8, scoped, tag = 'scoped memory for tpu_custom_call.1']
    #allocation11 [shape = 'u8[4096]{0}', space=vmem, size = 0x1000, scoped, tag = 'input window, operand 4']
    #allocation12 [shape = 'u8[16384]{0}', space=vmem, size = 0x4000, scoped, tag = 'output window, operand 0']
    %10 = vsyncpa [#allocation4], 0
    %s11 = scalar_lea.sflag [#allocation4], 1
    %12 = vsyncpa %s11, 0
    %13 = vsyncpa [#allocation7], 0
    %s14 = scalar_lea.sflag [#allocation7], 1
    %15 = vsyncpa %s14, 0
    %16 = vsyncpa [#allocation10], 0
    %s17 = scalar_lea.sflag [#allocation10], 1
    %18 = vsyncpa %s17, 0
    %19 = vsyncpa [#allocation5], 0
    %s20 = scalar_lea.sflag [#allocation5], 1
    %21 = vsyncpa %s20, 0
    loop: start=0, step=1, limit=10
    $region2: #{tpu_custom_call.1} parent=1 // loop_pre_header
      _
    $region3: #{tpu_custom_call.1} parent=1 // loop_header
      %s23 = sphi 0, %s27
      %p24 = scmp.ge.s32.totalorder %s23, 10
      %s30 = sphi 0, %s49
      %s31 = sphi 0, %s45
      %s32 = sphi 0, %s41
      %s33 = sphi 0, %s30
      %s34 = sphi 0, %s31
      %s35 = sphi 0, %s32
      %s36 = sphi 0, %s33
      %s37 = sphi 0, %s34
      %s38 = sphi 0, %s35
      %s54 = sphi 0, %s56
      %s57 = sphi 0, %s54
      %s58 = sphi 0, %s57
      %s74 = sphi 0, %s58
      %s82 = sphi 0, %s84
      %s85 = sphi 0, %s82
      %s86 = sphi 0, %s85
      %s102 = sphi 0, %s86
      %s110 = sphi 0, %s112
      %s113 = sphi 0, %s110
      %s114 = sphi 0, %s113
      %s130 = sphi 0, %s114
      %s138 = sphi 0, %s140
      %s141 = sphi 0, %s138
      %s142 = sphi 0, %s141
      %s158 = sphi 0, %s142
      %s164 = sphi 0, %s166
      %s167 = sphi 0, %s164
      %s168 = sphi 0, %s167
      %s184 = sphi 0, %s168
      %s192 = sphi 0, %s194
      %s195 = sphi 0, %s192
      %s196 = sphi 0, %s195
      %s212 = sphi 0, %s196
    $region4: #{tpu_custom_call.1} parent=1 // loop_header_branch
      %26 = sbr.rel (%p24) target = $region8
    $region5: #{tpu_custom_call.1} parent=1 // loop_body
      %s28 = ssub.s32 %s23, 1
      %s29 = ssub.s32 %s23, 2
      %s39 = sadd.s32 1, %s32
      %p40 = scmp.ge.s32.totalorder %s39, 2
      %s41 = scalar_select %p40, 0, %s39
      %s42 = sadd.s32 1, %s31
      %s43 = scalar_select %p40, %s42, %s31
      %p44 = scmp.ge.s32.totalorder %s43, 2
      %s45 = scalar_select %p44, 0, %s43
      %s46 = sadd.s32 1, %s30
      %s47 = scalar_select %p44, %s46, %s30
      %p48 = scmp.ge.s32.totalorder %s47, 2
      %s49 = scalar_select %p48, 0, %s47
      %s50 = ssub.s32 %s30, %s49
      %s51 = ssub.s32 %s32, %s41
      %s52 = sor.u32 %s50, %s51
      %p53 = scmp.eq.s32.totalorder %s52, 0
      %s55 = sadd.s32 %s54, 1
      %s56 = scalar_select %p53, %s54, %s55
      %p59 = pneg %p53
      %p60 = scmp.eq.s32.totalorder %s23, 7
      %p61 = por %p59, %p60
      %p62 = scmp.ne.s32.totalorder %s54, %s57
      %p63 = scmp.eq.s32.totalorder %s23, 0
      %p64 = por %p62, %p63
      %p65 = scmp.ne.s32.totalorder %s54, %s57
      %p66 = scmp.eq.s32.totalorder %s28, 7
      %p67 = por %p65, %p66
      %p68 = scmp.ne.s32.totalorder %s57, %s58
      %p69 = scmp.eq.s32.totalorder %s28, 0
      %p70 = por %p68, %p69
      %p71 = scmp.ne.s32.totalorder %s57, %s58
      %p72 = scmp.eq.s32.totalorder %s29, 7
      %p73 = por %p71, %p72
      %p75 = scmp.ne.s32.totalorder %s58, %s74
      %p76 = scmp.eq.s32.totalorder %s29, 0
      %p77 = por %p75, %p76
      %s78 = ssub.s32 %s31, %s45
      %s79 = ssub.s32 %s32, %s41
      %s80 = sor.u32 %s78, %s79
      %p81 = scmp.eq.s32.totalorder %s80, 0
      %s83 = sadd.s32 %s82, 1
      %s84 = scalar_select %p81, %s82, %s83
      %p87 = pneg %p81
      %p88 = scmp.eq.s32.totalorder %s23, 7
      %p89 = por %p87, %p88
      %p90 = scmp.ne.s32.totalorder %s82, %s85
      %p91 = scmp.eq.s32.totalorder %s23, 0
      %p92 = por %p90, %p91
      %p93 = scmp.ne.s32.totalorder %s82, %s85
      %p94 = scmp.eq.s32.totalorder %s28, 7
      %p95 = por %p93, %p94
      %p96 = scmp.ne.s32.totalorder %s85, %s86
      %p97 = scmp.eq.s32.totalorder %s28, 0
      %p98 = por %p96, %p97
      %p99 = scmp.ne.s32.totalorder %s85, %s86
      %p100 = scmp.eq.s32.totalorder %s29, 7
      %p101 = por %p99, %p100
      %p103 = scmp.ne.s32.totalorder %s86, %s102
      %p104 = scmp.eq.s32.totalorder %s29, 0
      %p105 = por %p103, %p104
      %s106 = ssub.s32 %s31, %s45
      %s107 = ssub.s32 %s32, %s41
      %s108 = sor.u32 %s106, %s107
      %p109 = scmp.eq.s32.totalorder %s108, 0
      %s111 = sadd.s32 %s110, 1
      %s112 = scalar_select %p109, %s110, %s111
      %p115 = pneg %p109
      %p116 = scmp.eq.s32.totalorder %s23, 7
      %p117 = por %p115, %p116
      %p118 = scmp.ne.s32.totalorder %s110, %s113
      %p119 = scmp.eq.s32.totalorder %s23, 0
      %p120 = por %p118, %p119
      %p121 = scmp.ne.s32.totalorder %s110, %s113
      %p122 = scmp.eq.s32.totalorder %s28, 7
      %p123 = por %p121, %p122
      %p124 = scmp.ne.s32.totalorder %s113, %s114
      %p125 = scmp.eq.s32.totalorder %s28, 0
      %p126 = por %p124, %p125
      %p127 = scmp.ne.s32.totalorder %s113, %s114
      %p128 = scmp.eq.s32.totalorder %s29, 7
      %p129 = por %p127, %p128
      %p131 = scmp.ne.s32.totalorder %s114, %s130
      %p132 = scmp.eq.s32.totalorder %s29, 0
      %p133 = por %p131, %p132
      %s134 = ssub.s32 %s31, %s45
      %s135 = ssub.s32 %s32, %s41
      %s136 = sor.u32 %s134, %s135
      %p137 = scmp.eq.s32.totalorder %s136, 0
      %s139 = sadd.s32 %s138, 1
      %s140 = scalar_select %p137, %s138, %s139
      %p143 = pneg %p137
      %p144 = scmp.eq.s32.totalorder %s23, 7
      %p145 = por %p143, %p144
      %p146 = scmp.ne.s32.totalorder %s138, %s141
      %p147 = scmp.eq.s32.totalorder %s23, 0
      %p148 = por %p146, %p147
      %p149 = scmp.ne.s32.totalorder %s138, %s141
      %p150 = scmp.eq.s32.totalorder %s28, 7
      %p151 = por %p149, %p150
      %p152 = scmp.ne.s32.totalorder %s141, %s142
      %p153 = scmp.eq.s32.totalorder %s28, 0
      %p154 = por %p152, %p153
      %p155 = scmp.ne.s32.totalorder %s141, %s142
      %p156 = scmp.eq.s32.totalorder %s29, 7
      %p157 = por %p155, %p156
      %p159 = scmp.ne.s32.totalorder %s142, %s158
      %p160 = scmp.eq.s32.totalorder %s29, 0
      %p161 = por %p159, %p160
      %s162 = ssub.s32 %s31, %s45
      %p163 = scmp.eq.s32.totalorder %s162, 0
      %s165 = sadd.s32 %s164, 1
      %s166 = scalar_select %p163, %s164, %s165
      %p169 = pneg %p163
      %p170 = scmp.eq.s32.totalorder %s23, 7
      %p171 = por %p169, %p170
      %p172 = scmp.ne.s32.totalorder %s164, %s167
      %p173 = scmp.eq.s32.totalorder %s23, 0
      %p174 = por %p172, %p173
      %p175 = scmp.ne.s32.totalorder %s164, %s167
      %p176 = scmp.eq.s32.totalorder %s28, 7
      %p177 = por %p175, %p176
      %p178 = scmp.ne.s32.totalorder %s167, %s168
      %p179 = scmp.eq.s32.totalorder %s28, 0
      %p180 = por %p178, %p179
      %p181 = scmp.ne.s32.totalorder %s167, %s168
      %p182 = scmp.eq.s32.totalorder %s29, 7
      %p183 = por %p181, %p182
      %p185 = scmp.ne.s32.totalorder %s168, %s184
      %p186 = scmp.eq.s32.totalorder %s29, 0
      %p187 = por %p185, %p186
      %s188 = ssub.s32 %s30, %s49
      %s189 = ssub.s32 %s31, %s45
      %s190 = sor.u32 %s188, %s189
      %p191 = scmp.eq.s32.totalorder %s190, 0
      %s193 = sadd.s32 %s192, 1
      %s194 = scalar_select %p191, %s192, %s193
      %p197 = pneg %p191
      %p198 = scmp.eq.s32.totalorder %s23, 7
      %p199 = por %p197, %p198
      %p200 = scmp.ne.s32.totalorder %s192, %s195
      %p201 = scmp.eq.s32.totalorder %s23, 0
      %p202 = por %p200, %p201
      %p203 = scmp.ne.s32.totalorder %s192, %s195
      %p204 = scmp.eq.s32.totalorder %s28, 7
      %p205 = por %p203, %p204
      %p206 = scmp.ne.s32.totalorder %s195, %s196
      %p207 = scmp.eq.s32.totalorder %s28, 0
      %p208 = por %p206, %p207
      %p209 = scmp.ne.s32.totalorder %s195, %s196
      %p210 = scmp.eq.s32.totalorder %s29, 7
      %p211 = por %p209, %p210
      %p213 = scmp.ne.s32.totalorder %s196, %s212
      %p214 = scmp.eq.s32.totalorder %s29, 0
      %p215 = por %p213, %p214
      %p216 = scmp.le.s32.totalorder 1, %s23
      %p217 = scmp.lt.s32.totalorder %s23, 9
      %p218 = pnand %p216, %p217
      %p219 = pneg %p218
      // Predicated region
      $region9: #{tpu_custom_call.1} parent=5 // pred_check
        _
      $region10: #{tpu_custom_call.1} parent=5 // pred_check_branch
        %221 = sbr.rel (%p218) target = $region12
      $region11: #{tpu_custom_call.1} parent=5 // pred_region
        %s222 = ssub.s32 %s23, 1
      $region12: #{tpu_custom_call.1} parent=5 // pred_fallthru
        _
      %p223 = scmp.lt.s32.totalorder %s23, 8
      // Predicated region
      $region13: #{tpu_custom_call.1} parent=5 // pred_check
        %p224 = pneg %p223
      $region14: #{tpu_custom_call.1} parent=5 // pred_check_branch
        %226 = sbr.rel (%p224) target = $region16
      $region15: #{tpu_custom_call.1} parent=5 // pred_region
        // Predicated region
        $region17: #{tpu_custom_call.1} parent=15 // pred_check
          %p227 = pneg %p64
        $region18: #{tpu_custom_call.1} parent=15 // pred_check_branch
          %229 = sbr.rel (%p227) target = $region20
        $region19: #{tpu_custom_call.1} parent=15 // pred_region
          %s230 = sand.u32 %s54, 1
          %s231 = scalar_lea.sflag [#allocation4], %s230
          %s232 = sand.u32 %s54, 1
          %s233 = smul.addr %s232, 16
          %s234 = scalar_lea.vmem [#allocation3], %s233
          %s235 = smul.u32 2, %s30
          %237 = vsyncadd %s231, 0
          %s238 = smul.addr %s235, 2
          %s239 = sadd.s32 %s32, %s238
          %s240 = smul.addr %s239, 8
          %s241 = scalar_lea.hbm %s0, %s240
          %s242 = sshll.u32 %s241, 4
          %s243 = int_to_ptr.hbm [resolvable:$true] %s242
          %s244 = sshll.u32 %s234, 4
          %s245 = int_to_ptr.vmem [resolvable:$true] %s244
          %250 = dma.hbm_to_vmem [thread:$0]  %s243, 256, %s245, %s231, 256, 128, 8
        $region20: #{tpu_custom_call.1} parent=15 // pred_fallthru
          _
        // Predicated region
        $region21: #{tpu_custom_call.1} parent=15 // pred_check
          %p251 = pneg %p92
        $region22: #{tpu_custom_call.1} parent=15 // pred_check_branch
          %253 = sbr.rel (%p251) target = $region24
        $region23: #{tpu_custom_call.1} parent=15 // pred_region
          %s254 = sand.u32 %s23, 1
          %s255 = scalar_lea.sflag [#allocation7], %s254
          %s256 = sand.u32 %s82, 1
          %s257 = smul.addr %s256, 128
          %s258 = scalar_lea.vmem [#allocation6], %s257
          %s259 = smul.u32 16, %s31
          %261 = vsyncadd %s255, 0
          %s262 = smul.addr %s259, 2
          %s263 = sadd.s32 %s32, %s262
          %s264 = smul.addr %s263, 8
          %s265 = scalar_lea.hbm %s1, %s264
          %s266 = sshll.u32 %s265, 4
          %s267 = int_to_ptr.hbm [resolvable:$true] %s266
          %s268 = sshll.u32 %s258, 4
          %s269 = int_to_ptr.vmem [resolvable:$true] %s268
          %274 = dma.hbm_to_vmem [thread:$0]  %s267, 2048, %s269, %s255, 256, 128, 8
        $region24: #{tpu_custom_call.1} parent=15 // pred_fallthru
          _
        // Predicated region
        $region25: #{tpu_custom_call.1} parent=15 // pred_check
          %p275 = pneg %p120
        $region26: #{tpu_custom_call.1} parent=15 // pred_check_branch
          %277 = sbr.rel (%p275) target = $region28
        $region27: #{tpu_custom_call.1} parent=15 // pred_region
          %s278 = sand.u32 %s23, 1
          %s279 = scalar_lea.sflag [#allocation7], %s278
          %s280 = sand.u32 %s110, 1
          %s281 = smul.addr %s280, 128
          %s282 = scalar_lea.vmem [#allocation8], %s281
          %s283 = smul.u32 16, %s31
          %285 = vsyncadd %s279, 0
          %s286 = smul.addr %s283, 2
          %s287 = sadd.s32 %s32, %s286
          %s288 = smul.addr %s287, 8
          %s289 = scalar_lea.hbm %s2, %s288
          %s290 = sshll.u32 %s289, 4
          %s291 = int_to_ptr.hbm [resolvable:$true] %s290
          %s292 = sshll.u32 %s282, 4
          %s293 = int_to_ptr.vmem [resolvable:$true] %s292
          %298 = dma.hbm_to_vmem [thread:$0]  %s291, 2048, %s293, %s279, 256, 128, 8
        $region28: #{tpu_custom_call.1} parent=15 // pred_fallthru
          _
        // Predicated region
        $region29: #{tpu_custom_call.1} parent=15 // pred_check
          %p299 = pneg %p148
        $region30: #{tpu_custom_call.1} parent=15 // pred_check_branch
          %301 = sbr.rel (%p299) target = $region32
        $region31: #{tpu_custom_call.1} parent=15 // pred_region
          %s302 = sand.u32 %s23, 1
          %s303 = scalar_lea.sflag [#allocation10], %s302
          %s304 = sand.u32 %s138, 1
          %s305 = smul.addr %s304, 128
          %s306 = scalar_lea.vmem [#allocation9], %s305
          %s307 = smul.u32 16, %s31
          %309 = vsyncadd %s303, 0
          %s310 = smul.addr %s307, 2
          %s311 = sadd.s32 %s32, %s310
          %s312 = smul.addr %s311, 8
          %s313 = scalar_lea.hbm %s3, %s312
          %s314 = sshll.u32 %s313, 4
          %s315 = int_to_ptr.hbm [resolvable:$true] %s314
          %s316 = sshll.u32 %s306, 4
          %s317 = int_to_ptr.vmem [resolvable:$true] %s316
          %322 = dma.hbm_to_vmem [thread:$0]  %s315, 2048, %s317, %s303, 256, 128, 8
        $region32: #{tpu_custom_call.1} parent=15 // pred_fallthru
          _
        // Predicated region
        $region33: #{tpu_custom_call.1} parent=15 // pred_check
          %p323 = pneg %p174
        $region34: #{tpu_custom_call.1} parent=15 // pred_check_branch
          %325 = sbr.rel (%p323) target = $region36
        $region35: #{tpu_custom_call.1} parent=15 // pred_region
          %s326 = sand.u32 %s23, 1
          %s327 = scalar_lea.sflag [#allocation10], %s326
          %s328 = sand.u32 %s164, 1
          %s329 = smul.addr %s328, 4
          %s330 = scalar_lea.vmem [#allocation11], %s329
          %332 = vsyncadd %s327, 0
          %s333 = smul.addr %s31, 4
          %s334 = scalar_lea.hbm %s4, %s333
          %s336 = sshll.u32 %s334, 4
          %s337 = int_to_ptr.hbm [resolvable:$true] %s336
          %s338 = sshll.u32 %s330, 4
          %s339 = int_to_ptr.vmem [resolvable:$true] %s338
          %341 = dma.hbm_to_vmem [thread:$0]  %s337, 64, %s339, %s327
        $region36: #{tpu_custom_call.1} parent=15 // pred_fallthru
          _
      $region16: #{tpu_custom_call.1} parent=5 // pred_fallthru
        _
      %p342 = scmp.le.s32.totalorder 1, %s23
      %p343 = scmp.lt.s32.totalorder %s23, 9
      %p344 = pnand %p342, %p343
      %p345 = pneg %p344
      // Predicated region
      $region37: #{tpu_custom_call.1} parent=5 // pred_check
        _
      $region38: #{tpu_custom_call.1} parent=5 // pred_check_branch
        %347 = sbr.rel (%p344) target = $region40
      $region39: #{tpu_custom_call.1} parent=5 // pred_region
        %s348 = ssub.s32 %s23, 1
        %s349 = sand.u32 %s57, 1
        %s350 = scalar_lea.sflag [#allocation4], %s349
        %s351 = sand.u32 %s57, 1
        %s352 = smul.addr %s351, 16
        %s353 = scalar_lea.vmem [#allocation3], %s352
        // Predicated region
        $region41: #{tpu_custom_call.1} parent=39 // pred_check
          %p354 = pneg %p70
        $region42: #{tpu_custom_call.1} parent=39 // pred_check_branch
          %356 = sbr.rel (%p354) target = $region44
        $region43: #{tpu_custom_call.1} parent=39 // pred_region
          %358 = dma.done %s350, 256
        $region44: #{tpu_custom_call.1} parent=39 // pred_fallthru
          _
        %s359 = sand.u32 %s28, 1
        %s360 = scalar_lea.sflag [#allocation7], %s359
        %s361 = sand.u32 %s85, 1
        %s362 = smul.addr %s361, 128
        %s363 = scalar_lea.vmem [#allocation6], %s362
        // Predicated region
        $region45: #{tpu_custom_call.1} parent=39 // pred_check
          %p364 = pneg %p98
        $region46: #{tpu_custom_call.1} parent=39 // pred_check_branch
          %366 = sbr.rel (%p364) target = $region48
        $region47: #{tpu_custom_call.1} parent=39 // pred_region
          %368 = dma.done %s360, 2048
        $region48: #{tpu_custom_call.1} parent=39 // pred_fallthru
          _
        %s369 = sand.u32 %s28, 1
        %s370 = scalar_lea.sflag [#allocation7], %s369
        %s371 = sand.u32 %s113, 1
        %s372 = smul.addr %s371, 128
        %s373 = scalar_lea.vmem [#allocation8], %s372
        // Predicated region
        $region49: #{tpu_custom_call.1} parent=39 // pred_check
          %p374 = pneg %p126
        $region50: #{tpu_custom_call.1} parent=39 // pred_check_branch
          %376 = sbr.rel (%p374) target = $region52
        $region51: #{tpu_custom_call.1} parent=39 // pred_region
          %378 = dma.done %s370, 2048
        $region52: #{tpu_custom_call.1} parent=39 // pred_fallthru
          _
        %s379 = sand.u32 %s28, 1
        %s380 = scalar_lea.sflag [#allocation10], %s379
        %s381 = sand.u32 %s141, 1
        %s382 = smul.addr %s381, 128
        %s383 = scalar_lea.vmem [#allocation9], %s382
        // Predicated region
        $region53: #{tpu_custom_call.1} parent=39 // pred_check
          %p384 = pneg %p154
        $region54: #{tpu_custom_call.1} parent=39 // pred_check_branch
          %386 = sbr.rel (%p384) target = $region56
        $region55: #{tpu_custom_call.1} parent=39 // pred_region
          %388 = dma.done %s380, 2048
        $region56: #{tpu_custom_call.1} parent=39 // pred_fallthru
          _
        %s389 = sand.u32 %s28, 1
        %s390 = scalar_lea.sflag [#allocation10], %s389
        %s391 = sand.u32 %s167, 1
        %s392 = smul.addr %s391, 4
        %s393 = scalar_lea.vmem [#allocation11], %s392
        // Predicated region
        $region57: #{tpu_custom_call.1} parent=39 // pred_check
          %p394 = pneg %p180
        $region58: #{tpu_custom_call.1} parent=39 // pred_check_branch
          %396 = sbr.rel (%p394) target = $region60
        $region59: #{tpu_custom_call.1} parent=39 // pred_region
          %398 = dma.done %s390, 64
        $region60: #{tpu_custom_call.1} parent=39 // pred_fallthru
          _
        %s399 = sand.u32 %s57, 1
        %s400 = scalar_lea.sflag [#allocation4], %s399
        %s401 = sand.u32 %s57, 1
        %s402 = smul.addr %s401, 16
        %s403 = scalar_lea.vmem [#allocation3], %s402
        %p404 = pneg %p70
        %p405 = pneg %p67
        %s406 = sand.u32 %s28, 1
        %s407 = scalar_lea.sflag [#allocation7], %s406
        %s408 = sand.u32 %s85, 1
        %s409 = smul.addr %s408, 128
        %s410 = scalar_lea.vmem [#allocation6], %s409
        %p411 = pneg %p98
        %p412 = pneg %p95
        %s413 = sand.u32 %s28, 1
        %s414 = scalar_lea.sflag [#allocation7], %s413
        %s415 = sand.u32 %s113, 1
        %s416 = smul.addr %s415, 128
        %s417 = scalar_lea.vmem [#allocation8], %s416
        %p418 = pneg %p126
        %p419 = pneg %p123
        %s420 = sand.u32 %s28, 1
        %s421 = scalar_lea.sflag [#allocation10], %s420
        %s422 = sand.u32 %s141, 1
        %s423 = smul.addr %s422, 128
        %s424 = scalar_lea.vmem [#allocation9], %s423
        %p425 = pneg %p154
        %p426 = pneg %p151
        %s427 = sand.u32 %s28, 1
        %s428 = scalar_lea.sflag [#allocation10], %s427
        %s429 = sand.u32 %s167, 1
        %s430 = smul.addr %s429, 4
        %s431 = scalar_lea.vmem [#allocation11], %s430
        %p432 = pneg %p180
        %p433 = pneg %p177
        %p434 = pneg %p208
        %p435 = pneg %p205
        %s436 = sand.u32 %s195, 1
        %s437 = scalar_lea.sflag [#allocation5], %s436
        %s438 = sand.u32 %s195, 1
        %s439 = smul.addr %s438, 16
        %s440 = scalar_lea.vmem [#allocation12], %s439
        %s441 = smul.u32 2, %s33
        %s442 = smul.u32 16, %s34
        %s443 = smul.u32 16, %s34
        %s444 = smul.u32 16, %s34
        %s445 = smul.u32 2, %s33
        %p446 = scmp.eq.s32.totalorder %s35, 0
        // Predicated region
        $region61: #{tpu_custom_call.1} parent=39 // pred_check
          %p447 = pneg %p446
        $region62: #{tpu_custom_call.1} parent=39 // pred_check_branch
          %449 = sbr.rel (%p447) target = $region64
        $region63: #{tpu_custom_call.1} parent=39 // pred_region
          %450 = vst [vmem:[#allocation2] sm:$0xff] 0.0
          %451 = vst [vmem:[#allocation2 + $0x8] sm:$0xff] 0.0
        $region64: #{tpu_custom_call.1} parent=39 // pred_fallthru
          _
        %v452 = vld [vmem:[%s363] sm:$0xff]
        %v453 = vld [vmem:[%s363 + $0x8] sm:$0xff]
        %v454 = vld [vmem:[%s363 + $0x10] sm:$0xff]
        %v455 = vld [vmem:[%s363 + $0x18] sm:$0xff]
        %v456 = vld [vmem:[%s363 + $0x20] sm:$0xff]
        %v457 = vld [vmem:[%s363 + $0x28] sm:$0xff]
        %v458 = vld [vmem:[%s363 + $0x30] sm:$0xff]
        %v459 = vld [vmem:[%s363 + $0x38] sm:$0xff]
        %v460 = vld [vmem:[%s363 + $0x40] sm:$0xff]
        %v461 = vld [vmem:[%s363 + $0x48] sm:$0xff]
        %v462 = vld [vmem:[%s363 + $0x50] sm:$0xff]
        %v463 = vld [vmem:[%s363 + $0x58] sm:$0xff]
        %v464 = vld [vmem:[%s363 + $0x60] sm:$0xff]
        %v465 = vld [vmem:[%s363 + $0x68] sm:$0xff]
        %v466 = vld [vmem:[%s363 + $0x70] sm:$0xff]
        %v467 = vld [vmem:[%s363 + $0x78] sm:$0xff]
        %v468 = vld [vmem:[%s383] sm:$0xff]
        %v469 = vld [vmem:[%s383 + $0x8] sm:$0xff]
        %v470 = vld [vmem:[%s383 + $0x10] sm:$0xff]
        %v471 = vld [vmem:[%s383 + $0x18] sm:$0xff]
        %v472 = vld [vmem:[%s383 + $0x20] sm:$0xff]
        %v473 = vld [vmem:[%s383 + $0x28] sm:$0xff]
        %v474 = vld [vmem:[%s383 + $0x30] sm:$0xff]
        %v475 = vld [vmem:[%s383 + $0x38] sm:$0xff]
        %v476 = vld [vmem:[%s383 + $0x40] sm:$0xff]
        %v477 = vld [vmem:[%s383 + $0x48] sm:$0xff]
        %v478 = vld [vmem:[%s383 + $0x50] sm:$0xff]
        %v479 = vld [vmem:[%s383 + $0x58] sm:$0xff]
        %v480 = vld [vmem:[%s383 + $0x60] sm:$0xff]
        %v481 = vld [vmem:[%s383 + $0x68] sm:$0xff]
        %v482 = vld [vmem:[%s383 + $0x70] sm:$0xff]
        %v483 = vld [vmem:[%s383 + $0x78] sm:$0xff]
        %v484 = vld [vmem:[%s373] sm:$0xff]
        %v485 = vld [vmem:[%s373 + $0x8] sm:$0xff]
        %v486 = vld [vmem:[%s373 + $0x10] sm:$0xff]
        %v487 = vld [vmem:[%s373 + $0x18] sm:$0xff]
        %v488 = vld [vmem:[%s373 + $0x20] sm:$0xff]
        %v489 = vld [vmem:[%s373 + $0x28] sm:$0xff]
        %v490 = vld [vmem:[%s373 + $0x30] sm:$0xff]
        %v491 = vld [vmem:[%s373 + $0x38] sm:$0xff]
        %v492 = vld [vmem:[%s373 + $0x40] sm:$0xff]
        %v493 = vld [vmem:[%s373 + $0x48] sm:$0xff]
        %v494 = vld [vmem:[%s373 + $0x50] sm:$0xff]
        %v495 = vld [vmem:[%s373 + $0x58] sm:$0xff]
        %v496 = vld [vmem:[%s373 + $0x60] sm:$0xff]
        %v497 = vld [vmem:[%s373 + $0x68] sm:$0xff]
        %v498 = vld [vmem:[%s373 + $0x70] sm:$0xff]
        %v499 = vld [vmem:[%s373 + $0x78] sm:$0xff]
        %v500 = vand.u32 2147483647, %v484
        %v501 = vand.u32 2147483647, %v485
        %v502 = vand.u32 2147483647, %v486
        %v503 = vand.u32 2147483647, %v487
        %v504 = vand.u32 2147483647, %v488
        %v505 = vand.u32 2147483647, %v489
        %v506 = vand.u32 2147483647, %v490
        %v507 = vand.u32 2147483647, %v491
        %v508 = vand.u32 2147483647, %v492
        %v509 = vand.u32 2147483647, %v493
        %v510 = vand.u32 2147483647, %v494
        %v511 = vand.u32 2147483647, %v495
        %v512 = vand.u32 2147483647, %v496
        %v513 = vand.u32 2147483647, %v497
        %v514 = vand.u32 2147483647, %v498
        %v515 = vand.u32 2147483647, %v499
        %v516 = vmul.f32 %v468, %v500
        %v517 = vmul.f32 %v469, %v501
        %v518 = vmul.f32 %v470, %v502
        %v519 = vmul.f32 %v471, %v503
        %v520 = vmul.f32 %v472, %v504
        %v521 = vmul.f32 %v473, %v505
        %v522 = vmul.f32 %v474, %v506
        %v523 = vmul.f32 %v475, %v507
        %v524 = vmul.f32 %v476, %v508
        %v525 = vmul.f32 %v477, %v509
        %v526 = vmul.f32 %v478, %v510
        %v527 = vmul.f32 %v479, %v511
        %v528 = vmul.f32 %v480, %v512
        %v529 = vmul.f32 %v481, %v513
        %v530 = vmul.f32 %v482, %v514
        %v531 = vmul.f32 %v483, %v515
        %v532 = vadd.f32 %v452, %v516
        %v533 = vadd.f32 %v453, %v517
        %v534 = vadd.f32 %v454, %v518
        %v535 = vadd.f32 %v455, %v519
        %v536 = vadd.f32 %v456, %v520
        %v537 = vadd.f32 %v457, %v521
        %v538 = vadd.f32 %v458, %v522
        %v539 = vadd.f32 %v459, %v523
        %v540 = vadd.f32 %v460, %v524
        %v541 = vadd.f32 %v461, %v525
        %v542 = vadd.f32 %v462, %v526
        %v543 = vadd.f32 %v463, %v527
        %v544 = vadd.f32 %v464, %v528
        %v545 = vadd.f32 %v465, %v529
        %v546 = vadd.f32 %v466, %v530
        %v547 = vadd.f32 %v467, %v531
        %v548 = vld [vmem:[#allocation2] sm:$0xff]
        %v549 = vld [vmem:[#allocation2 + $0x8] sm:$0xff]
        %v550 = vld [vmem:[%s353] sm:$0xff]
        %v551 = vld [vmem:[%s353 + $0x8] sm:$0xff]
        %552 = vmatpush.xpose.msra.mxu0 %v547
        %553 = vmatpush.xpose.msra.mxu0 %v546
        %554 = vmatpush.xpose.msra.mxu0 %v545
        %555 = vmatpush.xpose.msra.mxu0 %v544
        %556 = vmatpush.xpose.msra.mxu0 %v543
        %557 = vmatpush.xpose.msra.mxu0 %v542
        %558 = vmatpush.xpose.msra.mxu0 %v541
        %559 = vmatpush.xpose.msra.mxu0 %v540
        %560 = vmatpush.xpose.msra.mxu0 %v539
        %561 = vmatpush.xpose.msra.mxu0 %v538
        %562 = vmatpush.xpose.msra.mxu0 %v537
        %563 = vmatpush.xpose.msra.mxu0 %v536
        %564 = vmatpush.xpose.msra.mxu0 %v535
        %565 = vmatpush.xpose.msra.mxu0 %v534
        %566 = vmatpush.xpose.msra.mxu0 %v533
        %567 = vmatpush.xpose.msra.mxu0 %v532
        %568 = vmatmul.f32.gmra.mxu0 %v550
        %v569 = vpop.f32.mrf.mxu0
        %v570 = vadd.f32 0.0, %v569
        %571 = vmatmul.f32.gmra.mxu0 %v551
        %v572 = vpop.f32.mrf.mxu0
        %v573 = vadd.f32 0.0, %v572
        %574 = vdwg.mxu0
        %v575 = vadd.f32 %v548, %v570
        %v576 = vadd.f32 %v549, %v573
        %577 = vst [vmem:[#allocation2] sm:$0xff] %v575
        %578 = vst [vmem:[#allocation2 + $0x8] sm:$0xff] %v576
        %p579 = scmp.eq.s32.totalorder %s35, 1
        // Predicated region
        $region65: #{tpu_custom_call.1} parent=39 // pred_check
          %p580 = pneg %p579
        $region66: #{tpu_custom_call.1} parent=39 // pred_check_branch
          %582 = sbr.rel (%p580) target = $region68
        $region67: #{tpu_custom_call.1} parent=39 // pred_region
          %v583 = vld [vmem:[%s393] sm:$0x1]
          %v584 = vld [vmem:[%s393 + $0x1] sm:$0x1]
          %v585 = vld [vmem:[%s393 + $0x2] sm:$0x1]
          %v586 = vand.u32 2147483647, %v584
          %v587 = vmul.f32 %v585, %v586
          %v588 = vadd.f32 %v583, %v587
          %v589 = vld [vmem:[#allocation2] sm:$0xff]
          %v590 = vld [vmem:[#allocation2 + $0x8] sm:$0xff]
          %v591 = vperm.slane %v588, 0
          %v592 = vadd.f32 %v589, %v591
          %v593 = vadd.f32 %v590, %v591
          %594 = vst [vmem:[%s440] sm:$0xff] %v592
          %595 = vst [vmem:[%s440 + $0x8] sm:$0xff] %v593
        $region68: #{tpu_custom_call.1} parent=39 // pred_fallthru
          _
        %s596 = sand.u32 %s195, 1
        %s597 = scalar_lea.sflag [#allocation5], %s596
        %s598 = sand.u32 %s195, 1
        %s599 = smul.addr %s598, 16
        %s600 = scalar_lea.vmem [#allocation12], %s599
        // Predicated region
        $region69: #{tpu_custom_call.1} parent=39 // pred_check
          %p601 = pneg %p205
        $region70: #{tpu_custom_call.1} parent=39 // pred_check_branch
          %603 = sbr.rel (%p601) target = $region72
        $region71: #{tpu_custom_call.1} parent=39 // pred_region
          %s604 = smul.u32 2, %s33
          %606 = vsyncadd %s597, 0
          %s607 = smul.addr %s604, 2
          %s608 = sadd.s32 %s34, %s607
          %s609 = smul.addr %s608, 8
          %s610 = scalar_lea.hbm %s5, %s609
          %s611 = sshll.u32 %s600, 4
          %s612 = int_to_ptr.vmem [resolvable:$true] %s611
          %s613 = sshll.u32 %s610, 4
          %s614 = int_to_ptr.hbm [resolvable:$true] %s613
          %619 = dma.vmem_to_hbm [thread:$0]  %s612, 256, %s614, %s597, 128, 256, 8
        $region72: #{tpu_custom_call.1} parent=39 // pred_fallthru
          _
      $region40: #{tpu_custom_call.1} parent=5 // pred_fallthru
        _
      %p620 = scmp.le.s32.totalorder 2, %s23
      // Predicated region
      $region73: #{tpu_custom_call.1} parent=5 // pred_check
        %p621 = pneg %p620
      $region74: #{tpu_custom_call.1} parent=5 // pred_check_branch
        %623 = sbr.rel (%p621) target = $region76
      $region75: #{tpu_custom_call.1} parent=5 // pred_region
        %s624 = ssub.s32 %s23, 2
        // Predicated region
        $region77: #{tpu_custom_call.1} parent=75 // pred_check
          %p625 = pneg %p211
        $region78: #{tpu_custom_call.1} parent=75 // pred_check_branch
          %627 = sbr.rel (%p625) target = $region80
        $region79: #{tpu_custom_call.1} parent=75 // pred_region
          %s628 = sand.u32 %s196, 1
          %s629 = scalar_lea.sflag [#allocation5], %s628
          %s630 = sand.u32 %s196, 1
          %s631 = smul.addr %s630, 16
          %s632 = scalar_lea.vmem [#allocation12], %s631
          %634 = dma.done %s629, 256
        $region80: #{tpu_custom_call.1} parent=75 // pred_fallthru
          _
      $region76: #{tpu_custom_call.1} parent=5 // pred_fallthru
        _
    $region6: #{tpu_custom_call.1} parent=1 // loop_footer
      %s27 = sadd.s32 1, %s23
    $region7: #{tpu_custom_call.1} parent=1 // loop_footer_branch
      %22 = sbr.rel target = $region3
    $region8: #{tpu_custom_call.1} parent=1 // loop_exit
      _
    %635 = vsyncpa [#allocation4], 1
    %s636 = scalar_lea.sflag [#allocation4], 1
    %637 = vsyncpa %s636, 1
    %638 = vsyncpa [#allocation7], 1
    %s639 = scalar_lea.sflag [#allocation7], 1
    %640 = vsyncpa %s639, 1
    %641 = vsyncpa [#allocation10], 1
    %s642 = scalar_lea.sflag [#allocation10], 1
    %643 = vsyncpa %s642, 1
    %644 = vsyncpa [#allocation5], 1
    %s645 = scalar_lea.sflag [#allocation5], 1
    %646 = vsyncpa %s645, 1

</llo_original>
